<compile_context>
chip_gen: v5e
topology: v5e:2x2
jax: 0.10.0
libtpu: 0.0.40
codegen_flags: <defaults>
</compile_context>

<pallas_src>
import jax
import jax.numpy as jnp
from jax.experimental import pallas as pl
from jax.experimental.pallas import tpu as pltpu

_LANE = 128


def _round_up(x, m):
    return ((x + m - 1) // m) * m


def _make_mlp_kernel(n_layers):
    """Kernel running the whole (BN-folded) MLP for one batch tile.

    Ref order: x, (w, b) * n_layers, out.  The last (w, b) pair is the
    classifier head (no ReLU).  Weights bf16, biases f32, f32 MXU accumulation.
    """

    def kernel(*refs):
        x_ref = refs[0]
        out_ref = refs[-1]
        p = refs[1:-1]

        h = x_ref[...].astype(jnp.bfloat16)
        for li in range(n_layers - 1):
            w_ref, b_ref = p[2 * li], p[2 * li + 1]
            acc = jnp.dot(h, w_ref[...], preferred_element_type=jnp.float32)
            # Folded BN shift/bias + ReLU; Dropout is identity in eval mode.
            h = jnp.maximum(acc + b_ref[...], 0.0).astype(jnp.bfloat16)
        w_ref, b_ref = p[-2], p[-1]
        acc = jnp.dot(h, w_ref[...], preferred_element_type=jnp.float32)
        out_ref[...] = (acc + b_ref[...]).astype(out_ref.dtype)

    return kernel


def _fold_and_pad_params(params, latent_dim):
    """Fold BN into the Linears, cast weights to bf16, pad hidden widths to 128.

    Returns packed = [(w0, b0), ..., (wf, bf)] with
      w: (in, out_padded) bf16   (first in = latent_dim, final out = num_classes)
      b: (1, out_padded)  f32
    """
    hidden = params["hidden"]
    w_f, b_f = params["final"]

    in_dim = latent_dim
    packed = []
    for (w, b, s, c) in hidden:
        w_fold = (w * s).astype(jnp.bfloat16)     # fold BN scale into weights
        b_fold = (b * s + c).astype(jnp.float32)  # fold BN shift into bias
        out_p = _round_up(w.shape[1], _LANE)
        w_pad = jnp.zeros((in_dim, out_p), jnp.bfloat16).at[
            : w.shape[0], : w.shape[1]].set(w_fold)
        b_pad = jnp.zeros((1, out_p), jnp.float32).at[:, : b.shape[1]].set(b_fold)
        packed.append((w_pad, b_pad))
        in_dim = out_p

    wf_pad = jnp.zeros((in_dim, w_f.shape[1]), jnp.bfloat16).at[
        : w_f.shape[0], :].set(w_f.astype(jnp.bfloat16))
    packed.append((wf_pad, b_f.astype(jnp.float32)))
    return packed


def latent_space_binary_classifier(x, params, *, batch_tile=None):
    """Forward pass of LatentSpaceBinaryClassifier via a single Pallas kernel.

    x:      (B, latent_dim) float32
    params: dict with
        'hidden': list of (w (in,out), b (1,out), bn_scale (1,out), bn_shift (1,out))
        'final' : (w (in,num_classes), b (1,num_classes))
    """
    B, latent_dim = x.shape
    num_classes = params["final"][0].shape[1]

    packed = _fold_and_pad_params(params, latent_dim)
    n_layers = len(packed)

    # Batch tile: large enough to amortize per-step overhead; for non-tiny
    # batches produce >= 2 grid steps so both v7x TensorCores get work.
    if batch_tile is None:
        if B <= 256:
            batch_tile = _round_up(max(B, 1), 8)
        else:
            batch_tile = min(1024, _round_up(pl.cdiv(B, 2), 8))
    batch_tile = _round_up(batch_tile, 8)
    B_pad = _round_up(max(B, 1), batch_tile)
    grid = (B_pad // batch_tile,)

    # Row-pad only (no lane padding of latent features); jnp.pad avoids the
    # zeros().at[].set() extra HBM round trip over x.
    x32 = x.astype(jnp.float32)
    if B_pad != B:
        x32 = jnp.pad(x32, ((0, B_pad - B), (0, 0)))

    # Explicit VMEM budget: params (x2 headroom for double-buffer fallback)
    # + pipelined in/out tiles + a few live f32 activation tiles.
    param_bytes = sum(int(w.size) * 2 + int(b.size) * 4 for (w, b) in packed)
    max_width = max(max(int(w.shape[1]) for (w, _) in packed), latent_dim)
    act_bytes = 4 * batch_tile * max_width * 4
    io_bytes = 2 * batch_tile * (latent_dim + num_classes) * 4
    vmem_limit = int(min(max(2 * param_bytes + act_bytes + io_bytes, 16 << 20),
                         64 << 20))

    kernel = _make_mlp_kernel(n_layers)
    out_shape = jax.ShapeDtypeStruct((B_pad, num_classes), jnp.float32)
    out_spec = pl.BlockSpec((batch_tile, num_classes), lambda i: (i, 0))
    x_spec = pl.BlockSpec((batch_tile, latent_dim), lambda i: (i, 0))

    flat_params = []
    for (w, b) in packed:
        flat_params.append(w)
        flat_params.append(b)

    def run(single_buffer_params):
        kwargs = (dict(pipeline_mode=pl.Buffered(1))
                  if single_buffer_params else {})
        in_specs = [x_spec]
        for (w, b) in packed:
            # Constant index_map -> replicated across the grid; one buffer
            # suffices (halves weight VMEM; matters on 64 MiB v7x).
            in_specs.append(pl.BlockSpec(w.shape, lambda i: (0, 0), **kwargs))
            in_specs.append(pl.BlockSpec(b.shape, lambda i: (0, 0), **kwargs))
        return pl.pallas_call(
            kernel,
            grid=grid,
            in_specs=in_specs,
            out_specs=out_spec,
            out_shape=out_shape,
            compiler_params=pltpu.CompilerParams(
                dimension_semantics=("parallel",),
                vmem_limit_bytes=vmem_limit),
        )(x32, *flat_params)

    try:
        out_full = run(True)
    except Exception:
        # pl.Buffered(1) rejected by this jax/Mosaic version -> default
        # double-buffered replicated params.
        out_full = run(False)

    return out_full[:B]


def init_params(key, latent_dim, num_classes, hidden_units_list, eps=1e-5):
    """Deterministic parameter init mirroring the module's shapes.

    Linear weights are stored transposed (in, out).  BatchNorm uses the
    fresh-module eval defaults (gamma=1, beta=0, running_mean=0,
    running_var=1) kept as per-feature (scale, shift); folding into the
    weights happens in the wrapper.
    """
    all_units = [latent_dim] + list(hidden_units_list)
    hidden = []
    for i in range(len(all_units) - 1):
        fan_in, fan_out = all_units[i], all_units[i + 1]
        key, kw, kb = jax.random.split(key, 3)
        w = (jax.random.normal(kw, (fan_in, fan_out), jnp.float32)
             * (1.0 / jnp.sqrt(fan_in)))
        b = jax.random.normal(kb, (1, fan_out), jnp.float32) * 0.01
        gamma = jnp.ones((1, fan_out), jnp.float32)
        beta = jnp.zeros((1, fan_out), jnp.float32)
        running_mean = jnp.zeros((1, fan_out), jnp.float32)
        running_var = jnp.ones((1, fan_out), jnp.float32)
        scale = gamma / jnp.sqrt(running_var + eps)
        shift = beta - running_mean * scale
        hidden.append((w, b, scale, shift))

    fan_in = all_units[-1]
    key, kw, kb = jax.random.split(key, 3)
    w_f = (jax.random.normal(kw, (fan_in, num_classes), jnp.float32)
           * (1.0 / jnp.sqrt(fan_in)))
    b_f = jax.random.normal(kb, (1, num_classes), jnp.float32) * 0.01
    return {"hidden": hidden, "final": (w_f, b_f)}


def reference_forward(x, params):
    """Pure fp32 JAX reference (same eval-mode semantics)."""
    h = x.astype(jnp.float32)
    for (w, b, s, c) in params["hidden"]:
        h = jnp.maximum((h @ w + b) * s + c, 0.0)
    w_f, b_f = params["final"]
    return h @ w_f + b_f


def reference_forward_bf16(x, params):
    """Reference using the kernel's exact bf16 cast points (tight parity)."""
    h = x.astype(jnp.bfloat16)
    for (w, b, s, c) in params["hidden"]:
        w_fold = (w * s).astype(jnp.bfloat16)
        b_fold = (b * s + c).astype(jnp.float32)
        acc = jnp.dot(h, w_fold, preferred_element_type=jnp.float32)
        h = jnp.maximum(acc + b_fold, 0.0).astype(jnp.bfloat16)
    w_f, b_f = params["final"]
    acc = jnp.dot(h, w_f.astype(jnp.bfloat16),
                  preferred_element_type=jnp.float32)
    return acc + b_f.astype(jnp.float32)


if __name__ == "__main__":
    # Small shapes consistent with the module: latent vectors in, logits out.
    batch = 16
    latent_dim = 32
    hidden_units_list = [64, 32]
    num_classes = 2

    key = jax.random.PRNGKey(0)
    key, kx = jax.random.split(key)
    x = jax.random.normal(kx, (batch, latent_dim), jnp.float32)
    params = init_params(key, latent_dim, num_classes, hidden_units_list)

    out = latent_space_binary_classifier(x, params)
    out = jax.block_until_ready(out)
    assert out.shape == (batch, num_classes)

    # Tight parity against a reference with matching bf16 cast points, loose
    # parity against the pure fp32 reference (bf16 weight quantization).
    assert jnp.allclose(out, reference_forward_bf16(x, params),
                        atol=5e-3, rtol=5e-3)
    assert jnp.allclose(out, reference_forward(x, params), atol=1e-1, rtol=1e-1)

    # Multi-tile path (grid >= 2) with a non-divisible batch, default tiling.
    key, kx2 = jax.random.split(key)
    x_big = jax.random.normal(kx2, (300, latent_dim), jnp.float32)
    out_big = latent_space_binary_classifier(x_big, params)
    out_big = jax.block_until_ready(out_big)
    assert out_big.shape == (300, num_classes)
    assert jnp.allclose(out_big, reference_forward_bf16(x_big, params),
                        atol=5e-3, rtol=5e-3)

    # Explicit smaller tile exercises more grid steps + row padding; results
    # must match the default-tiling run exactly (rows are independent).
    out_tiled = latent_space_binary_classifier(x_big, params, batch_tile=128)
    out_tiled = jax.block_until_ready(out_tiled)
    assert jnp.allclose(out_tiled, out_big, atol=1e-5, rtol=1e-5)

    print("KERNEL_OK")
</pallas_src>

<mosaic_0001>
module attributes {stable_mosaic.version = 11 : i64} {
  func.func @kernel(%arg0: i32, %arg1: memref<16x32xf32, #tpu.memory_space<vmem>>, %arg2: memref<32x128xbf16, #tpu.memory_space<vmem>>, %arg3: memref<1x128xf32, #tpu.memory_space<vmem>>, %arg4: memref<128x128xbf16, #tpu.memory_space<vmem>>, %arg5: memref<1x128xf32, #tpu.memory_space<vmem>>, %arg6: memref<128x2xbf16, #tpu.memory_space<vmem>>, %arg7: memref<1x2xf32, #tpu.memory_space<vmem>>, %arg8: memref<16x2xf32, #tpu.memory_space<vmem>>) attributes {dimension_semantics = [#tpu.dimension_semantics<parallel>], iteration_bounds = array<i64: 1>, scalar_prefetch = 0 : i64, scratch_operands = 0 : i64, tpu.core_type = #tpu.core_type<tc>, window_params = [{transform_indices = @transform_0, window_bounds = array<i64: 16, 32>}, {pipeline_mode = #tpu.pipeline_mode<synchronous>, transform_indices = @transform_1, window_bounds = array<i64: 32, 128>}, {pipeline_mode = #tpu.pipeline_mode<synchronous>, transform_indices = @transform_2, window_bounds = array<i64: 1, 128>}, {pipeline_mode = #tpu.pipeline_mode<synchronous>, transform_indices = @transform_3, window_bounds = array<i64: 128, 128>}, {pipeline_mode = #tpu.pipeline_mode<synchronous>, transform_indices = @transform_4, window_bounds = array<i64: 1, 128>}, {pipeline_mode = #tpu.pipeline_mode<synchronous>, transform_indices = @transform_5, window_bounds = array<i64: 128, 2>}, {pipeline_mode = #tpu.pipeline_mode<synchronous>, transform_indices = @transform_6, window_bounds = array<i64: 1, 2>}, {transform_indices = @transform_7, window_bounds = array<i64: 16, 2>}]} {
    %c0 = arith.constant 0 : index
    %c0_0 = arith.constant 0 : index
    %0 = vector.load %arg1[%c0, %c0_0] : memref<16x32xf32, #tpu.memory_space<vmem>>, vector<16x32xf32>
    %1 = arith.truncf %0 : vector<16x32xf32> to vector<16x32xbf16>
    %c0_1 = arith.constant 0 : index
    %c0_2 = arith.constant 0 : index
    %2 = vector.load %arg2[%c0_1, %c0_2] : memref<32x128xbf16, #tpu.memory_space<vmem>>, vector<32x128xbf16>
    %cst = arith.constant dense<0.000000e+00> : vector<16x128xf32>
    %3 = tpu.matmul %1, %2, %cst {dimension_numbers = #tpu.dot_dimension_numbers<[1], [0], [0], [1], [0, 0, 1, 1], [], []>} : vector<16x32xbf16>, vector<32x128xbf16>, vector<16x128xf32> -> vector<16x128xf32>
    %c0_3 = arith.constant 0 : index
    %c0_4 = arith.constant 0 : index
    %4 = vector.load %arg3[%c0_3, %c0_4] : memref<1x128xf32, #tpu.memory_space<vmem>>, vector<1x128xf32>
    %5 = vector.broadcast %4 : vector<1x128xf32> to vector<16x128xf32>
    %6 = arith.addf %3, %5 : vector<16x128xf32>
    %cst_5 = arith.constant 0.000000e+00 : f32
    %7 = vector.broadcast %cst_5 : f32 to vector<16x128xf32>
    %8 = arith.maximumf %6, %7 : vector<16x128xf32>
    %9 = arith.truncf %8 : vector<16x128xf32> to vector<16x128xbf16>
    %c0_6 = arith.constant 0 : index
    %c0_7 = arith.constant 0 : index
    %10 = vector.load %arg4[%c0_6, %c0_7] : memref<128x128xbf16, #tpu.memory_space<vmem>>, vector<128x128xbf16>
    %cst_8 = arith.constant dense<0.000000e+00> : vector<16x128xf32>
    %11 = tpu.matmul %9, %10, %cst_8 {dimension_numbers = #tpu.dot_dimension_numbers<[1], [0], [0], [1], [0, 0, 1, 1], [], []>} : vector<16x128xbf16>, vector<128x128xbf16>, vector<16x128xf32> -> vector<16x128xf32>
    %c0_9 = arith.constant 0 : index
    %c0_10 = arith.constant 0 : index
    %12 = vector.load %arg5[%c0_9, %c0_10] : memref<1x128xf32, #tpu.memory_space<vmem>>, vector<1x128xf32>
    %13 = vector.broadcast %12 : vector<1x128xf32> to vector<16x128xf32>
    %14 = arith.addf %11, %13 : vector<16x128xf32>
    %cst_11 = arith.constant 0.000000e+00 : f32
    %15 = vector.broadcast %cst_11 : f32 to vector<16x128xf32>
    %16 = arith.maximumf %14, %15 : vector<16x128xf32>
    %17 = arith.truncf %16 : vector<16x128xf32> to vector<16x128xbf16>
    %c0_12 = arith.constant 0 : index
    %c0_13 = arith.constant 0 : index
    %18 = vector.load %arg6[%c0_12, %c0_13] : memref<128x2xbf16, #tpu.memory_space<vmem>>, vector<128x2xbf16>
    %cst_14 = arith.constant dense<0.000000e+00> : vector<16x2xf32>
    %19 = tpu.matmul %17, %18, %cst_14 {dimension_numbers = #tpu.dot_dimension_numbers<[1], [0], [0], [1], [0, 0, 1, 1], [], []>} : vector<16x128xbf16>, vector<128x2xbf16>, vector<16x2xf32> -> vector<16x2xf32>
    %c0_15 = arith.constant 0 : index
    %c0_16 = arith.constant 0 : index
    %20 = vector.load %arg7[%c0_15, %c0_16] : memref<1x2xf32, #tpu.memory_space<vmem>>, vector<1x2xf32>
    %21 = vector.broadcast %20 : vector<1x2xf32> to vector<16x2xf32>
    %22 = arith.addf %19, %21 : vector<16x2xf32>
    %c0_17 = arith.constant 0 : index
    %c0_18 = arith.constant 0 : index
    %23 = vector.load %arg8[%c0_17, %c0_18] : memref<16x2xf32, #tpu.memory_space<vmem>>, vector<16x2xf32>
    tpu.vector_store %arg8[%c0_17, %c0_18], %22 {strides = array<i32>} : memref<16x2xf32, #tpu.memory_space<vmem>>, vector<16x2xf32>,
    return
  }
  func.func @transform_0(%arg0: i32) -> (i32, i32) {
    %c0_i32 = arith.constant 0 : i32
    %c0_i32_0 = arith.constant 0 : i32
    return %arg0, %c0_i32 : i32, i32
  }
  func.func @transform_1(%arg0: i32) -> (i32, i32) {
    %c0_i32 = arith.constant 0 : i32
    %c0_i32_0 = arith.constant 0 : i32
    %c0_i32_1 = arith.constant 0 : i32
    return %c0_i32, %c0_i32_0 : i32, i32
  }
  func.func @transform_2(%arg0: i32) -> (i32, i32) {
    %c0_i32 = arith.constant 0 : i32
    %c0_i32_0 = arith.constant 0 : i32
    %c0_i32_1 = arith.constant 0 : i32
    return %c0_i32, %c0_i32_0 : i32, i32
  }
  func.func @transform_3(%arg0: i32) -> (i32, i32) {
    %c0_i32 = arith.constant 0 : i32
    %c0_i32_0 = arith.constant 0 : i32
    %c0_i32_1 = arith.constant 0 : i32
    return %c0_i32, %c0_i32_0 : i32, i32
  }
  func.func @transform_4(%arg0: i32) -> (i32, i32) {
    %c0_i32 = arith.constant 0 : i32
    %c0_i32_0 = arith.constant 0 : i32
    %c0_i32_1 = arith.constant 0 : i32
    return %c0_i32, %c0_i32_0 : i32, i32
  }
  func.func @transform_5(%arg0: i32) -> (i32, i32) {
    %c0_i32 = arith.constant 0 : i32
    %c0_i32_0 = arith.constant 0 : i32
    %c0_i32_1 = arith.constant 0 : i32
    return %c0_i32, %c0_i32_0 : i32, i32
  }
  func.func @transform_6(%arg0: i32) -> (i32, i32) {
    %c0_i32 = arith.constant 0 : i32
    %c0_i32_0 = arith.constant 0 : i32
    %c0_i32_1 = arith.constant 0 : i32
    return %c0_i32, %c0_i32_0 : i32, i32
  }
  func.func @transform_7(%arg0: i32) -> (i32, i32) {
    %c0_i32 = arith.constant 0 : i32
    %c0_i32_0 = arith.constant 0 : i32
    return %arg0, %c0_i32 : i32, i32
  }
}

module attributes {stable_mosaic.version = 11 : i64} {
  func.func @kernel(%arg0: i32, %arg1: memref<16x32xf32, #tpu.memory_space<vmem>>, %arg2: memref<32x128xbf16, #tpu.memory_space<vmem>>, %arg3: memref<1x128xf32, #tpu.memory_space<vmem>>, %arg4: memref<128x128xbf16, #tpu.memory_space<vmem>>, %arg5: memref<1x128xf32, #tpu.memory_space<vmem>>, %arg6: memref<128x2xbf16, #tpu.memory_space<vmem>>, %arg7: memref<1x2xf32, #tpu.memory_space<vmem>>, %arg8: memref<16x2xf32, #tpu.memory_space<vmem>>) attributes {dimension_semantics = [#tpu.dimension_semantics<parallel>], iteration_bounds = array<i64: 1>, scalar_prefetch = 0 : i64, scratch_operands = 0 : i64, tpu.core_type = #tpu.core_type<tc>, window_params = [{transform_indices = @transform_0, window_bounds = array<i64: 16, 32>}, {pipeline_mode = #tpu.pipeline_mode<synchronous>, transform_indices = @transform_1, window_bounds = array<i64: 32, 128>}, {pipeline_mode = #tpu.pipeline_mode<synchronous>, transform_indices = @transform_2, window_bounds = array<i64: 1, 128>}, {pipeline_mode = #tpu.pipeline_mode<synchronous>, transform_indices = @transform_3, window_bounds = array<i64: 128, 128>}, {pipeline_mode = #tpu.pipeline_mode<synchronous>, transform_indices = @transform_4, window_bounds = array<i64: 1, 128>}, {pipeline_mode = #tpu.pipeline_mode<synchronous>, transform_indices = @transform_5, window_bounds = array<i64: 128, 2>}, {pipeline_mode = #tpu.pipeline_mode<synchronous>, transform_indices = @transform_6, window_bounds = array<i64: 1, 2>}, {transform_indices = @transform_7, window_bounds = array<i64: 16, 2>}]} {
    %c0 = arith.constant 0 : index
    %c0_0 = arith.constant 0 : index
    %0 = vector.load %arg1[%c0, %c0_0] : memref<16x32xf32, #tpu.memory_space<vmem>>, vector<16x32xf32>
    %1 = arith.truncf %0 : vector<16x32xf32> to vector<16x32xbf16>
    %c0_1 = arith.constant 0 : index
    %c0_2 = arith.constant 0 : index
    %2 = vector.load %arg2[%c0_1, %c0_2] : memref<32x128xbf16, #tpu.memory_space<vmem>>, vector<32x128xbf16>
    %cst = arith.constant dense<0.000000e+00> : vector<16x128xf32>
    %3 = tpu.matmul %1, %2, %cst {dimension_numbers = #tpu.dot_dimension_numbers<[1], [0], [0], [1], [0, 0, 1, 1], [], []>} : vector<16x32xbf16>, vector<32x128xbf16>, vector<16x128xf32> -> vector<16x128xf32>
    %c0_3 = arith.constant 0 : index
    %c0_4 = arith.constant 0 : index
    %4 = vector.load %arg3[%c0_3, %c0_4] : memref<1x128xf32, #tpu.memory_space<vmem>>, vector<1x128xf32>
    %5 = vector.broadcast %4 : vector<1x128xf32> to vector<16x128xf32>
    %6 = arith.addf %3, %5 : vector<16x128xf32>
    %cst_5 = arith.constant 0.000000e+00 : f32
    %7 = vector.broadcast %cst_5 : f32 to vector<16x128xf32>
    %8 = arith.maximumf %6, %7 : vector<16x128xf32>
    %9 = arith.truncf %8 : vector<16x128xf32> to vector<16x128xbf16>
    %c0_6 = arith.constant 0 : index
    %c0_7 = arith.constant 0 : index
    %10 = vector.load %arg4[%c0_6, %c0_7] : memref<128x128xbf16, #tpu.memory_space<vmem>>, vector<128x128xbf16>
    %cst_8 = arith.constant dense<0.000000e+00> : vector<16x128xf32>
    %11 = tpu.matmul %9, %10, %cst_8 {dimension_numbers = #tpu.dot_dimension_numbers<[1], [0], [0], [1], [0, 0, 1, 1], [], []>} : vector<16x128xbf16>, vector<128x128xbf16>, vector<16x128xf32> -> vector<16x128xf32>
    %c0_9 = arith.constant 0 : index
    %c0_10 = arith.constant 0 : index
    %12 = vector.load %arg5[%c0_9, %c0_10] : memref<1x128xf32, #tpu.memory_space<vmem>>, vector<1x128xf32>
    %13 = vector.broadcast %12 : vector<1x128xf32> to vector<16x128xf32>
    %14 = arith.addf %11, %13 : vector<16x128xf32>
    %cst_11 = arith.constant 0.000000e+00 : f32
    %15 = vector.broadcast %cst_11 : f32 to vector<16x128xf32>
    %16 = arith.maximumf %14, %15 : vector<16x128xf32>
    %17 = arith.truncf %16 : vector<16x128xf32> to vector<16x128xbf16>
    %c0_12 = arith.constant 0 : index
    %c0_13 = arith.constant 0 : index
    %18 = vector.load %arg6[%c0_12, %c0_13] : memref<128x2xbf16, #tpu.memory_space<vmem>>, vector<128x2xbf16>
    %cst_14 = arith.constant dense<0.000000e+00> : vector<16x2xf32>
    %19 = tpu.matmul %17, %18, %cst_14 {dimension_numbers = #tpu.dot_dimension_numbers<[1], [0], [0], [1], [0, 0, 1, 1], [], []>} : vector<16x128xbf16>, vector<128x2xbf16>, vector<16x2xf32> -> vector<16x2xf32>
    %c0_15 = arith.constant 0 : index
    %c0_16 = arith.constant 0 : index
    %20 = vector.load %arg7[%c0_15, %c0_16] : memref<1x2xf32, #tpu.memory_space<vmem>>, vector<1x2xf32>
    %21 = vector.broadcast %20 : vector<1x2xf32> to vector<16x2xf32>
    %22 = arith.addf %19, %21 : vector<16x2xf32>
    %c0_17 = arith.constant 0 : index
    %c0_18 = arith.constant 0 : index
    %23 = vector.load %arg8[%c0_17, %c0_18] : memref<16x2xf32, #tpu.memory_space<vmem>>, vector<16x2xf32>
    tpu.vector_store %arg8[%c0_17, %c0_18], %22 {strides = array<i32>} : memref<16x2xf32, #tpu.memory_space<vmem>>, vector<16x2xf32>,
    return
  }
  func.func @transform_0(%arg0: i32) -> (i32, i32) {
    %c0_i32 = arith.constant 0 : i32
    %c0_i32_0 = arith.constant 0 : i32
    return %arg0, %c0_i32 : i32, i32
  }
  func.func @transform_1(%arg0: i32) -> (i32, i32) {
    %c0_i32 = arith.constant 0 : i32
    %c0_i32_0 = arith.constant 0 : i32
    %c0_i32_1 = arith.constant 0 : i32
    return %c0_i32, %c0_i32_0 : i32, i32
  }
  func.func @transform_2(%arg0: i32) -> (i32, i32) {
    %c0_i32 = arith.constant 0 : i32
    %c0_i32_0 = arith.constant 0 : i32
    %c0_i32_1 = arith.constant 0 : i32
    return %c0_i32, %c0_i32_0 : i32, i32
  }
  func.func @transform_3(%arg0: i32) -> (i32, i32) {
    %c0_i32 = arith.constant 0 : i32
    %c0_i32_0 = arith.constant 0 : i32
    %c0_i32_1 = arith.constant 0 : i32
    return %c0_i32, %c0_i32_0 : i32, i32
  }
  func.func @transform_4(%arg0: i32) -> (i32, i32) {
    %c0_i32 = arith.constant 0 : i32
    %c0_i32_0 = arith.constant 0 : i32
    %c0_i32_1 = arith.constant 0 : i32
    return %c0_i32, %c0_i32_0 : i32, i32
  }
  func.func @transform_5(%arg0: i32) -> (i32, i32) {
    %c0_i32 = arith.constant 0 : i32
    %c0_i32_0 = arith.constant 0 : i32
    %c0_i32_1 = arith.constant 0 : i32
    return %c0_i32, %c0_i32_0 : i32, i32
  }
  func.func @transform_6(%arg0: i32) -> (i32, i32) {
    %c0_i32 = arith.constant 0 : i32
    %c0_i32_0 = arith.constant 0 : i32
    %c0_i32_1 = arith.constant 0 : i32
    return %c0_i32, %c0_i32_0 : i32, i32
  }
  func.func @transform_7(%arg0: i32) -> (i32, i32) {
    %c0_i32 = arith.constant 0 : i32
    %c0_i32_0 = arith.constant 0 : i32
    return %arg0, %c0_i32 : i32, i32
  }
}

</mosaic_0001>

<llo_original>
// kernel: tpu_custom_call.1
$region0: #{tpu_custom_call.1}
  #allocation0 [shape = 'u32[]', space=smem, size = 0x4, offset = 0x4, fixed_abs, tag = 'smem constant byte address 0x4 - core index']
  #allocation1 [shape = 'u32[72,128]{1,0:T(1,128)}', space=vmem, size = 0x9000, scoped, tag = 'internal scratch']
  %s0 = inlined_call_operand.hbm [shape: f32[16,32], index: 0, kind: input, shape index: {}]
  %s1 = inlined_call_operand.hbm [shape: bf16[32,128], index: 1, kind: input, shape index: {}]
  %s2 = inlined_call_operand.vmem [shape: f32[1,128], index: 2, kind: input, shape index: {}]
  %s3 = inlined_call_operand.vmem [shape: bf16[128,128], index: 3, kind: input, shape index: {}]
  %s4 = inlined_call_operand.vmem [shape: f32[1,128], index: 4, kind: input, shape index: {}]
  %s5 = inlined_call_operand.vmem [shape: bf16[128,2], index: 5, kind: input, shape index: {}]
  %s6 = inlined_call_operand.vmem [shape: f32[1,2], index: 6, kind: input, shape index: {}]
  %s7 = inlined_call_operand.vmem [shape: f32[16,2], index: 7, kind: output, shape index: {}]
  %s8 = sld [smem:[#allocation0]]
  $region46: #{tpu_custom_call.1} parent=0
    _
  %s10 = ssub.s32 1, %s8
  %s11 = scalar_select 0, %s10, %s8
  $region1: #{tpu_custom_call.1} parent=0
    #allocation2 [shape = 'u8[8192]{0}', space=vmem, size = 0x2000, scoped, tag = 'input window, operand 0, single buffered']
    #allocation3 [shape = 's32[1]{0}', space=sflag, size = 0x4, scoped, tag = 'scoped memory for tpu_custom_call.1']
    #allocation4 [shape = 'u8[8192]{0}', space=vmem, size = 0x2000, scoped, tag = 'input window, operand 1, single buffered']
    #allocation5 [shape = 's32[1]{0}', space=sflag, size = 0x4, scoped, tag = 'scoped memory for tpu_custom_call.1']
    %12 = vsyncpa [#allocation3], 0
    %13 = vsyncpa [#allocation5], 0
    // Predicated region
    $region2: #{tpu_custom_call.1} parent=1 // pred_check
      _
    $region3: #{tpu_custom_call.1} parent=1 // pred_check_branch
      %15 = sbr.rel (0) target = $region5
    $region4: #{tpu_custom_call.1} parent=1 // pred_region
      %17 = vsyncadd [#allocation3], 0
      %s18 = sshll.u32 %s0, 4
      %s19 = int_to_ptr.hbm [resolvable:$true] %s18
      %s20 = sshll.u32 [#allocation2], 4
      %s21 = int_to_ptr.vmem [resolvable:$true] %s20
      %26 = dma.hbm_to_vmem [thread:$0]  %s19, 256, %s21, [#allocation3], 128, 128, 8
    $region5: #{tpu_custom_call.1} parent=1 // pred_fallthru
      _
    // Predicated region
    $region6: #{tpu_custom_call.1} parent=1 // pred_check
      _
    $region7: #{tpu_custom_call.1} parent=1 // pred_check_branch
      %28 = sbr.rel (0) target = $region9
    $region8: #{tpu_custom_call.1} parent=1 // pred_region
      %30 = vsyncadd [#allocation5], 0
      %s31 = sshll.u32 %s1, 4
      %s32 = int_to_ptr.hbm [resolvable:$true] %s31
      %s33 = sshll.u32 [#allocation4], 4
      %s34 = int_to_ptr.vmem [resolvable:$true] %s33
      %39 = dma.hbm_to_vmem [thread:$0]  %s32, 256, %s34, [#allocation5], 64, 64, 4
    $region9: #{tpu_custom_call.1} parent=1 // pred_fallthru
      _
    // Predicated region
    $region10: #{tpu_custom_call.1} parent=1 // pred_check
      _
    $region11: #{tpu_custom_call.1} parent=1 // pred_check_branch
      %41 = sbr.rel (0) target = $region13
    $region12: #{tpu_custom_call.1} parent=1 // pred_region
      _
    $region13: #{tpu_custom_call.1} parent=1 // pred_fallthru
      _
    // Predicated region
    $region14: #{tpu_custom_call.1} parent=1 // pred_check
      _
    $region15: #{tpu_custom_call.1} parent=1 // pred_check_branch
      %43 = sbr.rel (0) target = $region17
    $region16: #{tpu_custom_call.1} parent=1 // pred_region
      _
    $region17: #{tpu_custom_call.1} parent=1 // pred_fallthru
      _
    // Predicated region
    $region18: #{tpu_custom_call.1} parent=1 // pred_check
      _
    $region19: #{tpu_custom_call.1} parent=1 // pred_check_branch
      %45 = sbr.rel (0) target = $region21
    $region20: #{tpu_custom_call.1} parent=1 // pred_region
      _
    $region21: #{tpu_custom_call.1} parent=1 // pred_fallthru
      _
    // Predicated region
    $region22: #{tpu_custom_call.1} parent=1 // pred_check
      _
    $region23: #{tpu_custom_call.1} parent=1 // pred_check_branch
      %47 = sbr.rel (0) target = $region25
    $region24: #{tpu_custom_call.1} parent=1 // pred_region
      _
    $region25: #{tpu_custom_call.1} parent=1 // pred_fallthru
      _
    // Predicated region
    $region26: #{tpu_custom_call.1} parent=1 // pred_check
      _
    $region27: #{tpu_custom_call.1} parent=1 // pred_check_branch
      %49 = sbr.rel (0) target = $region29
    $region28: #{tpu_custom_call.1} parent=1 // pred_region
      _
    $region29: #{tpu_custom_call.1} parent=1 // pred_fallthru
      _
    // Predicated region
    $region30: #{tpu_custom_call.1} parent=1 // pred_check
      _
    $region31: #{tpu_custom_call.1} parent=1 // pred_check_branch
      %51 = sbr.rel (0) target = $region33
    $region32: #{tpu_custom_call.1} parent=1 // pred_region
      %53 = dma.done [#allocation3], 256
    $region33: #{tpu_custom_call.1} parent=1 // pred_fallthru
      _
    // Predicated region
    $region34: #{tpu_custom_call.1} parent=1 // pred_check
      _
    $region35: #{tpu_custom_call.1} parent=1 // pred_check_branch
      %55 = sbr.rel (0) target = $region37
    $region36: #{tpu_custom_call.1} parent=1 // pred_region
      %57 = dma.done [#allocation5], 256
    $region37: #{tpu_custom_call.1} parent=1 // pred_fallthru
      _
    %v59 = vld [vmem:[#allocation2] sm:$0xff]
    %v60 = vld [vmem:[#allocation2 + $0x8] sm:$0xff]
    %v61 = vpack.c.bf16 %v60, %v59
    %v62 = vld [vmem:[#allocation4] sm:$0xf]
    %v63 = vld [vmem:[#allocation4 + $0x4] sm:$0xf]
    %v64 = vld [vmem:[#allocation4 + $0x8] sm:$0xf]
    %v65 = vld [vmem:[#allocation4 + $0xc] sm:$0xf]
    %v66 = vld [vmem:[%s2] sm:$0x1]
    %v68 = vperm.slane %v66, 0
    %v74 = vunpack.c.l.b16 %v62
    %v75 = vunpack.c.l.b16 %v63
    %v76 = vunpack.c.l.b16 %v64
    %v77 = vunpack.c.l.b16 %v65
    %v78 = vpack.c.b16 %v75, %v74
    %v79 = vpack.c.b16 %v77, %v76
    %vm82 = vcmask 261120
    %v84 = vsel %vm82, %v61, 0
    %86 = vmatpush.bf16.msra.mxu0 0
    %87 = vmatpush.bf16.msra.mxu0 0
    %88 = vmatpush.bf16.msra.mxu0 0
    %89 = vmatpush.bf16.msra.mxu0 0
    %90 = vmatpush.bf16.msra.mxu0 0
    %91 = vmatpush.bf16.msra.mxu0 0
    %92 = vmatpush.bf16.msra.mxu0 %v79
    %93 = vmatpush.bf16.msra.mxu0 %v78
    %94 = vmatmul.bf16.gmra.mxu0 %v84
    %v95 = vpop.f32.mrf.mxu0
    %v96 = vadd.f32 %v68, %v95
    %v97 = vpop.f32.mrf.mxu0
    %v98 = vadd.f32 %v68, %v97
    %99 = vdwg.mxu0
    %v100 = vmax.f32 %v96, 0.0
    %v101 = vmax.f32 %v98, 0.0
    %v102 = vpack.c.bf16 %v101, %v100
    %v103 = vld [vmem:[%s3] sm:$0xf]
    %v104 = vld [vmem:[%s3 + $0x4] sm:$0xf]
    %v105 = vld [vmem:[%s3 + $0x8] sm:$0xf]
    %v106 = vld [vmem:[%s3 + $0xc] sm:$0xf]
    %v107 = vld [vmem:[%s3 + $0x10] sm:$0xf]
    %v108 = vld [vmem:[%s3 + $0x14] sm:$0xf]
    %v109 = vld [vmem:[%s3 + $0x18] sm:$0xf]
    %v110 = vld [vmem:[%s3 + $0x1c] sm:$0xf]
    %v111 = vld [vmem:[%s3 + $0x20] sm:$0xf]
    %v112 = vld [vmem:[%s3 + $0x24] sm:$0xf]
    %v113 = vld [vmem:[%s3 + $0x28] sm:$0xf]
    %v114 = vld [vmem:[%s3 + $0x2c] sm:$0xf]
    %v115 = vld [vmem:[%s3 + $0x30] sm:$0xf]
    %v116 = vld [vmem:[%s3 + $0x34] sm:$0xf]
    %v117 = vld [vmem:[%s3 + $0x38] sm:$0xf]
    %v118 = vld [vmem:[%s3 + $0x3c] sm:$0xf]
    %v119 = vld [vmem:[%s4] sm:$0x1]
    %v121 = vperm.slane %v119, 0
    %v139 = vunpack.c.l.b16 %v103
    %v140 = vunpack.c.l.b16 %v104
    %v141 = vunpack.c.l.b16 %v105
    %v142 = vunpack.c.l.b16 %v106
    %v143 = vunpack.c.l.b16 %v107
    %v144 = vunpack.c.l.b16 %v108
    %v145 = vunpack.c.l.b16 %v109
    %v146 = vunpack.c.l.b16 %v110
    %v147 = vunpack.c.l.b16 %v111
    %v148 = vunpack.c.l.b16 %v112
    %v149 = vunpack.c.l.b16 %v113
    %v150 = vunpack.c.l.b16 %v114
    %v151 = vunpack.c.l.b16 %v115
    %v152 = vunpack.c.l.b16 %v116
    %v153 = vunpack.c.l.b16 %v117
    %v154 = vunpack.c.l.b16 %v118
    %v155 = vpack.c.b16 %v140, %v139
    %v156 = vpack.c.b16 %v142, %v141
    %v157 = vpack.c.b16 %v144, %v143
    %v158 = vpack.c.b16 %v146, %v145
    %v159 = vpack.c.b16 %v148, %v147
    %v160 = vpack.c.b16 %v150, %v149
    %v161 = vpack.c.b16 %v152, %v151
    %v162 = vpack.c.b16 %v154, %v153
    %171 = vmatpush.bf16.msra.mxu0 %v162
    %172 = vmatpush.bf16.msra.mxu0 %v161
    %173 = vmatpush.bf16.msra.mxu0 %v160
    %174 = vmatpush.bf16.msra.mxu0 %v159
    %175 = vmatpush.bf16.msra.mxu0 %v158
    %176 = vmatpush.bf16.msra.mxu0 %v157
    %177 = vmatpush.bf16.msra.mxu0 %v156
    %178 = vmatpush.bf16.msra.mxu0 %v155
    %179 = vmatmul.bf16.gmra.mxu0 %v102
    %v180 = vpop.f32.mrf.mxu0
    %v181 = vadd.f32 %v121, %v180
    %v182 = vpop.f32.mrf.mxu0
    %v183 = vadd.f32 %v121, %v182
    %184 = vdwg.mxu0
    %v185 = vmax.f32 %v181, 0.0
    %v186 = vmax.f32 %v183, 0.0
    %v187 = vpack.c.bf16 %v186, %v185
    %v188 = vld [vmem:[%s5] sm:$0xf]
    %v189 = vld [vmem:[%s5 + $0x4] sm:$0xf]
    %v190 = vld [vmem:[%s5 + $0x8] sm:$0xf]
    %v191 = vld [vmem:[%s5 + $0xc] sm:$0xf]
    %v192 = vld [vmem:[%s5 + $0x10] sm:$0xf]
    %v193 = vld [vmem:[%s5 + $0x14] sm:$0xf]
    %v194 = vld [vmem:[%s5 + $0x18] sm:$0xf]
    %v195 = vld [vmem:[%s5 + $0x1c] sm:$0xf]
    %v196 = vld [vmem:[%s5 + $0x20] sm:$0xf]
    %v197 = vld [vmem:[%s5 + $0x24] sm:$0xf]
    %v198 = vld [vmem:[%s5 + $0x28] sm:$0xf]
    %v199 = vld [vmem:[%s5 + $0x2c] sm:$0xf]
    %v200 = vld [vmem:[%s5 + $0x30] sm:$0xf]
    %v201 = vld [vmem:[%s5 + $0x34] sm:$0xf]
    %v202 = vld [vmem:[%s5 + $0x38] sm:$0xf]
    %v203 = vld [vmem:[%s5 + $0x3c] sm:$0xf]
    %v204 = vld [vmem:[%s6] sm:$0x1]
    %v206 = vperm.slane %v204, 0
    %v224 = vunpack.c.l.b16 %v188
    %v225 = vunpack.c.l.b16 %v189
    %v226 = vunpack.c.l.b16 %v190
    %v227 = vunpack.c.l.b16 %v191
    %v228 = vunpack.c.l.b16 %v192
    %v229 = vunpack.c.l.b16 %v193
    %v230 = vunpack.c.l.b16 %v194
    %v231 = vunpack.c.l.b16 %v195
    %v232 = vunpack.c.l.b16 %v196
    %v233 = vunpack.c.l.b16 %v197
    %v234 = vunpack.c.l.b16 %v198
    %v235 = vunpack.c.l.b16 %v199
    %v236 = vunpack.c.l.b16 %v200
    %v237 = vunpack.c.l.b16 %v201
    %v238 = vunpack.c.l.b16 %v202
    %v239 = vunpack.c.l.b16 %v203
    %v240 = vpack.c.b16 %v225, %v224
    %v241 = vpack.c.b16 %v227, %v226
    %v242 = vpack.c.b16 %v229, %v228
    %v243 = vpack.c.b16 %v231, %v230
    %v244 = vpack.c.b16 %v233, %v232
    %v245 = vpack.c.b16 %v235, %v234
    %v246 = vpack.c.b16 %v237, %v236
    %v247 = vpack.c.b16 %v239, %v238
    %256 = vmatpush.bf16.msra.mxu0 %v247
    %257 = vmatpush.bf16.msra.mxu0 %v246
    %258 = vmatpush.bf16.msra.mxu0 %v245
    %259 = vmatpush.bf16.msra.mxu0 %v244
    %260 = vmatpush.bf16.msra.mxu0 %v243
    %261 = vmatpush.bf16.msra.mxu0 %v242
    %262 = vmatpush.bf16.msra.mxu0 %v241
    %263 = vmatpush.bf16.msra.mxu0 %v240
    %264 = vmatmul.bf16.gmra.mxu0 %v187
    %v265 = vpop.f32.mrf.mxu0
    %v266 = vadd.f32 %v206, %v265
    %v267 = vpop.f32.mrf.mxu0
    %v268 = vadd.f32 %v206, %v267
    %269 = vdwg.mxu0
    %vm270 = vcmask 15360
    %271 = vst.msk [vmem:[%s7] sm:$0xff] %vm270, %v266
    %272 = vst.msk [vmem:[%s7 + $0x8] sm:$0xff] %vm270, %v268
    // Predicated region
    $region38: #{tpu_custom_call.1} parent=1 // pred_check
      _
    $region39: #{tpu_custom_call.1} parent=1 // pred_check_branch
      %274 = sbr.rel (0) target = $region41
    $region40: #{tpu_custom_call.1} parent=1 // pred_region
      _
    $region41: #{tpu_custom_call.1} parent=1 // pred_fallthru
      _
    // Predicated region
    $region42: #{tpu_custom_call.1} parent=1 // pred_check
      _
    $region43: #{tpu_custom_call.1} parent=1 // pred_check_branch
      %276 = sbr.rel (0) target = $region45
    $region44: #{tpu_custom_call.1} parent=1 // pred_region
      _
    $region45: #{tpu_custom_call.1} parent=1 // pred_fallthru
      _
    %277 = vsyncpa [#allocation3], 1
    %278 = vsyncpa [#allocation5], 1

// kernel: tpu_custom_call.1
$region0: #{tpu_custom_call.1}
  #allocation0 [shape = 'u32[]', space=smem, size = 0x4, offset = 0x4, fixed_abs, tag = 'smem constant byte address 0x4 - core index']
  #allocation1 [shape = 'u32[72,128]{1,0:T(1,128)}', space=vmem, size = 0x9000, scoped, tag = 'internal scratch']
  %s0 = inlined_call_operand.hbm [shape: f32[16,32], index: 0, kind: input, shape index: {}]
  %s1 = inlined_call_operand.hbm [shape: bf16[32,128], index: 1, kind: input, shape index: {}]
  %s2 = inlined_call_operand.vmem [shape: f32[1,128], index: 2, kind: input, shape index: {}]
  %s3 = inlined_call_operand.vmem [shape: bf16[128,128], index: 3, kind: input, shape index: {}]
  %s4 = inlined_call_operand.vmem [shape: f32[1,128], index: 4, kind: input, shape index: {}]
  %s5 = inlined_call_operand.vmem [shape: bf16[128,2], index: 5, kind: input, shape index: {}]
  %s6 = inlined_call_operand.vmem [shape: f32[1,2], index: 6, kind: input, shape index: {}]
  %s7 = inlined_call_operand.vmem [shape: f32[16,2], index: 7, kind: output, shape index: {}]
  %s8 = sld [smem:[#allocation0]]
  $region46: #{tpu_custom_call.1} parent=0
    _
  %s10 = ssub.s32 1, %s8
  %s11 = scalar_select 0, %s10, %s8
  $region1: #{tpu_custom_call.1} parent=0
    #allocation2 [shape = 'u8[8192]{0}', space=vmem, size = 0x2000, scoped, tag = 'input window, operand 0, single buffered']
    #allocation3 [shape = 's32[1]{0}', space=sflag, size = 0x4, scoped, tag = 'scoped memory for tpu_custom_call.1']
    #allocation4 [shape = 'u8[8192]{0}', space=vmem, size = 0x2000, scoped, tag = 'input window, operand 1, single buffered']
    #allocation5 [shape = 's32[1]{0}', space=sflag, size = 0x4, scoped, tag = 'scoped memory for tpu_custom_call.1']
    %12 = vsyncpa [#allocation3], 0
    %13 = vsyncpa [#allocation5], 0
    // Predicated region
    $region2: #{tpu_custom_call.1} parent=1 // pred_check
      _
    $region3: #{tpu_custom_call.1} parent=1 // pred_check_branch
      %15 = sbr.rel (0) target = $region5
    $region4: #{tpu_custom_call.1} parent=1 // pred_region
      %17 = vsyncadd [#allocation3], 0
      %s18 = sshll.u32 %s0, 4
      %s19 = int_to_ptr.hbm [resolvable:$true] %s18
      %s20 = sshll.u32 [#allocation2], 4
      %s21 = int_to_ptr.vmem [resolvable:$true] %s20
      %26 = dma.hbm_to_vmem [thread:$0]  %s19, 256, %s21, [#allocation3], 128, 128, 8
    $region5: #{tpu_custom_call.1} parent=1 // pred_fallthru
      _
    // Predicated region
    $region6: #{tpu_custom_call.1} parent=1 // pred_check
      _
    $region7: #{tpu_custom_call.1} parent=1 // pred_check_branch
      %28 = sbr.rel (0) target = $region9
    $region8: #{tpu_custom_call.1} parent=1 // pred_region
      %30 = vsyncadd [#allocation5], 0
      %s31 = sshll.u32 %s1, 4
      %s32 = int_to_ptr.hbm [resolvable:$true] %s31
      %s33 = sshll.u32 [#allocation4], 4
      %s34 = int_to_ptr.vmem [resolvable:$true] %s33
      %39 = dma.hbm_to_vmem [thread:$0]  %s32, 256, %s34, [#allocation5], 64, 64, 4
    $region9: #{tpu_custom_call.1} parent=1 // pred_fallthru
      _
    // Predicated region
    $region10: #{tpu_custom_call.1} parent=1 // pred_check
      _
    $region11: #{tpu_custom_call.1} parent=1 // pred_check_branch
      %41 = sbr.rel (0) target = $region13
    $region12: #{tpu_custom_call.1} parent=1 // pred_region
      _
    $region13: #{tpu_custom_call.1} parent=1 // pred_fallthru
      _
    // Predicated region
    $region14: #{tpu_custom_call.1} parent=1 // pred_check
      _
    $region15: #{tpu_custom_call.1} parent=1 // pred_check_branch
      %43 = sbr.rel (0) target = $region17
    $region16: #{tpu_custom_call.1} parent=1 // pred_region
      _
    $region17: #{tpu_custom_call.1} parent=1 // pred_fallthru
      _
    // Predicated region
    $region18: #{tpu_custom_call.1} parent=1 // pred_check
      _
    $region19: #{tpu_custom_call.1} parent=1 // pred_check_branch
      %45 = sbr.rel (0) target = $region21
    $region20: #{tpu_custom_call.1} parent=1 // pred_region
      _
    $region21: #{tpu_custom_call.1} parent=1 // pred_fallthru
      _
    // Predicated region
    $region22: #{tpu_custom_call.1} parent=1 // pred_check
      _
    $region23: #{tpu_custom_call.1} parent=1 // pred_check_branch
      %47 = sbr.rel (0) target = $region25
    $region24: #{tpu_custom_call.1} parent=1 // pred_region
      _
    $region25: #{tpu_custom_call.1} parent=1 // pred_fallthru
      _
    // Predicated region
    $region26: #{tpu_custom_call.1} parent=1 // pred_check
      _
    $region27: #{tpu_custom_call.1} parent=1 // pred_check_branch
      %49 = sbr.rel (0) target = $region29
    $region28: #{tpu_custom_call.1} parent=1 // pred_region
      _
    $region29: #{tpu_custom_call.1} parent=1 // pred_fallthru
      _
    // Predicated region
    $region30: #{tpu_custom_call.1} parent=1 // pred_check
      _
    $region31: #{tpu_custom_call.1} parent=1 // pred_check_branch
      %51 = sbr.rel (0) target = $region33
    $region32: #{tpu_custom_call.1} parent=1 // pred_region
      %53 = dma.done [#allocation3], 256
    $region33: #{tpu_custom_call.1} parent=1 // pred_fallthru
      _
    // Predicated region
    $region34: #{tpu_custom_call.1} parent=1 // pred_check
      _
    $region35: #{tpu_custom_call.1} parent=1 // pred_check_branch
      %55 = sbr.rel (0) target = $region37
    $region36: #{tpu_custom_call.1} parent=1 // pred_region
      %57 = dma.done [#allocation5], 256
    $region37: #{tpu_custom_call.1} parent=1 // pred_fallthru
      _
    %v59 = vld [vmem:[#allocation2] sm:$0xff]
    %v60 = vld [vmem:[#allocation2 + $0x8] sm:$0xff]
    %v61 = vpack.c.bf16 %v60, %v59
    %v62 = vld [vmem:[#allocation4] sm:$0xf]
    %v63 = vld [vmem:[#allocation4 + $0x4] sm:$0xf]
    %v64 = vld [vmem:[#allocation4 + $0x8] sm:$0xf]
    %v65 = vld [vmem:[#allocation4 + $0xc] sm:$0xf]
    %v66 = vld [vmem:[%s2] sm:$0x1]
    %v68 = vperm.slane %v66, 0
    %v74 = vunpack.c.l.b16 %v62
    %v75 = vunpack.c.l.b16 %v63
    %v76 = vunpack.c.l.b16 %v64
    %v77 = vunpack.c.l.b16 %v65
    %v78 = vpack.c.b16 %v75, %v74
    %v79 = vpack.c.b16 %v77, %v76
    %vm82 = vcmask 261120
    %v84 = vsel %vm82, %v61, 0
    %86 = vmatpush.bf16.msra.mxu0 0
    %87 = vmatpush.bf16.msra.mxu0 0
    %88 = vmatpush.bf16.msra.mxu0 0
    %89 = vmatpush.bf16.msra.mxu0 0
    %90 = vmatpush.bf16.msra.mxu0 0
    %91 = vmatpush.bf16.msra.mxu0 0
    %92 = vmatpush.bf16.msra.mxu0 %v79
    %93 = vmatpush.bf16.msra.mxu0 %v78
    %94 = vmatmul.bf16.gmra.mxu0 %v84
    %v95 = vpop.f32.mrf.mxu0
    %v96 = vadd.f32 %v68, %v95
    %v97 = vpop.f32.mrf.mxu0
    %v98 = vadd.f32 %v68, %v97
    %99 = vdwg.mxu0
    %v100 = vmax.f32 %v96, 0.0
    %v101 = vmax.f32 %v98, 0.0
    %v102 = vpack.c.bf16 %v101, %v100
    %v103 = vld [vmem:[%s3] sm:$0xf]
    %v104 = vld [vmem:[%s3 + $0x4] sm:$0xf]
    %v105 = vld [vmem:[%s3 + $0x8] sm:$0xf]
    %v106 = vld [vmem:[%s3 + $0xc] sm:$0xf]
    %v107 = vld [vmem:[%s3 + $0x10] sm:$0xf]
    %v108 = vld [vmem:[%s3 + $0x14] sm:$0xf]
    %v109 = vld [vmem:[%s3 + $0x18] sm:$0xf]
    %v110 = vld [vmem:[%s3 + $0x1c] sm:$0xf]
    %v111 = vld [vmem:[%s3 + $0x20] sm:$0xf]
    %v112 = vld [vmem:[%s3 + $0x24] sm:$0xf]
    %v113 = vld [vmem:[%s3 + $0x28] sm:$0xf]
    %v114 = vld [vmem:[%s3 + $0x2c] sm:$0xf]
    %v115 = vld [vmem:[%s3 + $0x30] sm:$0xf]
    %v116 = vld [vmem:[%s3 + $0x34] sm:$0xf]
    %v117 = vld [vmem:[%s3 + $0x38] sm:$0xf]
    %v118 = vld [vmem:[%s3 + $0x3c] sm:$0xf]
    %v119 = vld [vmem:[%s4] sm:$0x1]
    %v121 = vperm.slane %v119, 0
    %v139 = vunpack.c.l.b16 %v103
    %v140 = vunpack.c.l.b16 %v104
    %v141 = vunpack.c.l.b16 %v105
    %v142 = vunpack.c.l.b16 %v106
    %v143 = vunpack.c.l.b16 %v107
    %v144 = vunpack.c.l.b16 %v108
    %v145 = vunpack.c.l.b16 %v109
    %v146 = vunpack.c.l.b16 %v110
    %v147 = vunpack.c.l.b16 %v111
    %v148 = vunpack.c.l.b16 %v112
    %v149 = vunpack.c.l.b16 %v113
    %v150 = vunpack.c.l.b16 %v114
    %v151 = vunpack.c.l.b16 %v115
    %v152 = vunpack.c.l.b16 %v116
    %v153 = vunpack.c.l.b16 %v117
    %v154 = vunpack.c.l.b16 %v118
    %v155 = vpack.c.b16 %v140, %v139
    %v156 = vpack.c.b16 %v142, %v141
    %v157 = vpack.c.b16 %v144, %v143
    %v158 = vpack.c.b16 %v146, %v145
    %v159 = vpack.c.b16 %v148, %v147
    %v160 = vpack.c.b16 %v150, %v149
    %v161 = vpack.c.b16 %v152, %v151
    %v162 = vpack.c.b16 %v154, %v153
    %171 = vmatpush.bf16.msra.mxu0 %v162
    %172 = vmatpush.bf16.msra.mxu0 %v161
    %173 = vmatpush.bf16.msra.mxu0 %v160
    %174 = vmatpush.bf16.msra.mxu0 %v159
    %175 = vmatpush.bf16.msra.mxu0 %v158
    %176 = vmatpush.bf16.msra.mxu0 %v157
    %177 = vmatpush.bf16.msra.mxu0 %v156
    %178 = vmatpush.bf16.msra.mxu0 %v155
    %179 = vmatmul.bf16.gmra.mxu0 %v102
    %v180 = vpop.f32.mrf.mxu0
    %v181 = vadd.f32 %v121, %v180
    %v182 = vpop.f32.mrf.mxu0
    %v183 = vadd.f32 %v121, %v182
    %184 = vdwg.mxu0
    %v185 = vmax.f32 %v181, 0.0
    %v186 = vmax.f32 %v183, 0.0
    %v187 = vpack.c.bf16 %v186, %v185
    %v188 = vld [vmem:[%s5] sm:$0xf]
    %v189 = vld [vmem:[%s5 + $0x4] sm:$0xf]
    %v190 = vld [vmem:[%s5 + $0x8] sm:$0xf]
    %v191 = vld [vmem:[%s5 + $0xc] sm:$0xf]
    %v192 = vld [vmem:[%s5 + $0x10] sm:$0xf]
    %v193 = vld [vmem:[%s5 + $0x14] sm:$0xf]
    %v194 = vld [vmem:[%s5 + $0x18] sm:$0xf]
    %v195 = vld [vmem:[%s5 + $0x1c] sm:$0xf]
    %v196 = vld [vmem:[%s5 + $0x20] sm:$0xf]
    %v197 = vld [vmem:[%s5 + $0x24] sm:$0xf]
    %v198 = vld [vmem:[%s5 + $0x28] sm:$0xf]
    %v199 = vld [vmem:[%s5 + $0x2c] sm:$0xf]
    %v200 = vld [vmem:[%s5 + $0x30] sm:$0xf]
    %v201 = vld [vmem:[%s5 + $0x34] sm:$0xf]
    %v202 = vld [vmem:[%s5 + $0x38] sm:$0xf]
    %v203 = vld [vmem:[%s5 + $0x3c] sm:$0xf]
    %v204 = vld [vmem:[%s6] sm:$0x1]
    %v206 = vperm.slane %v204, 0
    %v224 = vunpack.c.l.b16 %v188
    %v225 = vunpack.c.l.b16 %v189
    %v226 = vunpack.c.l.b16 %v190
    %v227 = vunpack.c.l.b16 %v191
    %v228 = vunpack.c.l.b16 %v192
    %v229 = vunpack.c.l.b16 %v193
    %v230 = vunpack.c.l.b16 %v194
    %v231 = vunpack.c.l.b16 %v195
    %v232 = vunpack.c.l.b16 %v196
    %v233 = vunpack.c.l.b16 %v197
    %v234 = vunpack.c.l.b16 %v198
    %v235 = vunpack.c.l.b16 %v199
    %v236 = vunpack.c.l.b16 %v200
    %v237 = vunpack.c.l.b16 %v201
    %v238 = vunpack.c.l.b16 %v202
    %v239 = vunpack.c.l.b16 %v203
    %v240 = vpack.c.b16 %v225, %v224
    %v241 = vpack.c.b16 %v227, %v226
    %v242 = vpack.c.b16 %v229, %v228
    %v243 = vpack.c.b16 %v231, %v230
    %v244 = vpack.c.b16 %v233, %v232
    %v245 = vpack.c.b16 %v235, %v234
    %v246 = vpack.c.b16 %v237, %v236
    %v247 = vpack.c.b16 %v239, %v238
    %256 = vmatpush.bf16.msra.mxu0 %v247
    %257 = vmatpush.bf16.msra.mxu0 %v246
    %258 = vmatpush.bf16.msra.mxu0 %v245
    %259 = vmatpush.bf16.msra.mxu0 %v244
    %260 = vmatpush.bf16.msra.mxu0 %v243
    %261 = vmatpush.bf16.msra.mxu0 %v242
    %262 = vmatpush.bf16.msra.mxu0 %v241
    %263 = vmatpush.bf16.msra.mxu0 %v240
    %264 = vmatmul.bf16.gmra.mxu0 %v187
    %v265 = vpop.f32.mrf.mxu0
    %v266 = vadd.f32 %v206, %v265
    %v267 = vpop.f32.mrf.mxu0
    %v268 = vadd.f32 %v206, %v267
    %269 = vdwg.mxu0
    %vm270 = vcmask 15360
    %271 = vst.msk [vmem:[%s7] sm:$0xff] %vm270, %v266
    %272 = vst.msk [vmem:[%s7 + $0x8] sm:$0xff] %vm270, %v268
    // Predicated region
    $region38: #{tpu_custom_call.1} parent=1 // pred_check
      _
    $region39: #{tpu_custom_call.1} parent=1 // pred_check_branch
      %274 = sbr.rel (0) target = $region41
    $region40: #{tpu_custom_call.1} parent=1 // pred_region
      _
    $region41: #{tpu_custom_call.1} parent=1 // pred_fallthru
      _
    // Predicated region
    $region42: #{tpu_custom_call.1} parent=1 // pred_check
      _
    $region43: #{tpu_custom_call.1} parent=1 // pred_check_branch
      %276 = sbr.rel (0) target = $region45
    $region44: #{tpu_custom_call.1} parent=1 // pred_region
      _
    $region45: #{tpu_custom_call.1} parent=1 // pred_fallthru
      _
    %277 = vsyncpa [#allocation3], 1
    %278 = vsyncpa [#allocation5], 1

</llo_original>
